<compile_context>
chip_gen: v6e
topology: v6e:2x2x1
jax: 0.10.0
libtpu: 0.0.40
codegen_flags: <defaults>
</compile_context>

<pallas_src>
import functools

import jax
import jax.numpy as jnp
from jax.experimental import pallas as pl
from jax.experimental.pallas import tpu as pltpu

LANES = 128          # TPU lane width; all feature dims are padded to this.
BN_EPS = 1e-5


def _round_up(n, m):
    return ((n + m - 1) // m) * m


# ---------------------------------------------------------------------------
# Kernel
# ---------------------------------------------------------------------------
def _mlp_kernel(x_ref,
                w1_ref, b1_ref,
                w2_ref, b2_ref,
                w3_ref, b3_ref,
                w4_ref, b4_ref,
                o_ref):
    """Fused 4-layer MLP on one (TB, 128) batch tile. BN is pre-folded into weights."""

    def linear(h, w_ref, b_ref):
        w = w_ref[...]
        # Cast activations to the weight dtype (no-op for f32; bf16 MXU path for bf16
        # weights); accumulate in f32 on the MXU.
        return jnp.dot(h.astype(w.dtype), w,
                       preferred_element_type=jnp.float32) + b_ref[...]

    h = x_ref[...]
    h = jnp.maximum(linear(h, w1_ref, b1_ref), 0.0)   # fc1 -> relu   (bn1 folded into fc2)
    h = jnp.maximum(linear(h, w2_ref, b2_ref), 0.0)   # fc2' -> relu  (bn2 folded into fc3)
    h = jnp.maximum(linear(h, w3_ref, b3_ref), 0.0)   # fc3' -> relu  (bn3 folded into fc4)
    z = linear(h, w4_ref, b4_ref)                     # fc4'

    # Numerically robust sigmoid (no inf intermediates); exp goes to the EUP.
    e = jnp.exp(-jnp.abs(z))
    r = 1.0 / (1.0 + e)
    o_ref[...] = jnp.where(z >= 0.0, r, e * r)


# ---------------------------------------------------------------------------
# Wrapper
# ---------------------------------------------------------------------------
@functools.partial(jax.jit, static_argnames=("tile_b",))
def experimental_net_forward(x, params, *, tile_b=512):
    """x: [B, input_dim] float32. params: folded + lane-padded parameter dict.

    Returns [B, 1] float32 (sigmoid output).
    """
    B, D = x.shape
    if D > LANES:
        raise ValueError(f"input_dim {D} > {LANES} not supported by this kernel")

    # Pad features to the 128-lane width and batch to a multiple of the batch tile
    # (tile rounded to the 8-sublane granule).
    tb = _round_up(min(tile_b, B), 8)
    b_pad = _round_up(B, tb)
    x_p = jnp.pad(x.astype(jnp.float32), ((0, b_pad - B), (0, LANES - D)))

    act_spec = pl.BlockSpec((tb, LANES), lambda i: (i, 0))       # streamed per grid step
    w_spec = pl.BlockSpec((LANES, LANES), lambda i: (0, 0))      # VMEM-resident weights
    b_spec = pl.BlockSpec((1, LANES), lambda i: (0, 0))          # VMEM-resident biases

    param_bytes = sum(int(params[k].size) * params[k].dtype.itemsize for k in params)
    cost = pl.CostEstimate(
        flops=2 * b_pad * LANES * LANES * 4,                     # 4 padded 128x128 matmuls
        transcendentals=b_pad * LANES,                           # final exp
        bytes_accessed=2 * b_pad * LANES * 4 + param_bytes,      # x stream + out + weights
    )

    out = pl.pallas_call(
        _mlp_kernel,
        out_shape=jax.ShapeDtypeStruct((b_pad, LANES), jnp.float32),
        grid=(b_pad // tb,),
        in_specs=[act_spec,
                  w_spec, b_spec,
                  w_spec, b_spec,
                  w_spec, b_spec,
                  w_spec, b_spec],
        out_specs=act_spec,
        compiler_params=pltpu.CompilerParams(
            dimension_semantics=("parallel",)),                  # shard batch across TCs (v7x)
        cost_estimate=cost,
    )(x_p,
      params["w1"], params["b1"],
      params["w2"], params["b2"],
      params["w3"], params["b3"],
      params["w4"], params["b4"])

    # Real logit lives in lane 0; padded lanes/rows are discarded here.
    return out[:B, :1]


# ---------------------------------------------------------------------------
# Parameter construction (torch-like raw params -> folded, lane-padded kernel params)
# ---------------------------------------------------------------------------
def _linear_init(key, fan_in, fan_out):
    """Mimic torch.nn.Linear default init: U(-1/sqrt(fan_in), 1/sqrt(fan_in))."""
    kw, kb = jax.random.split(key)
    bound = 1.0 / jnp.sqrt(fan_in)
    # Stored as [in, out] (transposed from PyTorch's [out, in]) so the hot path is x @ W.
    w = jax.random.uniform(kw, (fan_in, fan_out), jnp.float32, -bound, bound)
    b = jax.random.uniform(kb, (fan_out,), jnp.float32, -bound, bound)
    return w, b


def _bn_init(key, num_features):
    """Non-trivial eval-mode BatchNorm1d parameters/running stats (to exercise folding)."""
    kg, kb, km, kv = jax.random.split(key, 4)
    gamma = jax.random.uniform(kg, (num_features,), jnp.float32, 0.5, 1.5)
    beta = 0.1 * jax.random.normal(kb, (num_features,), jnp.float32)
    mean = 0.1 * jax.random.normal(km, (num_features,), jnp.float32)
    var = jax.random.uniform(kv, (num_features,), jnp.float32, 0.5, 1.5)
    return gamma, beta, mean, var


def make_raw_params(input_dim, key):
    """Raw (unfolded, unpadded) parameters matching the PyTorch module layout."""
    k1, k2, k3, k4, kb1, kb2, kb3 = jax.random.split(key, 7)
    w1, b1 = _linear_init(k1, input_dim, 64)
    w2, b2 = _linear_init(k2, 64, 128)
    w3, b3 = _linear_init(k3, 128, 64)
    w4, b4 = _linear_init(k4, 64, 1)
    g1, be1, m1, v1 = _bn_init(kb1, 64)
    g2, be2, m2, v2 = _bn_init(kb2, 128)
    g3, be3, m3, v3 = _bn_init(kb3, 64)
    return dict(w1=w1, b1=b1, w2=w2, b2=b2, w3=w3, b3=b3, w4=w4, b4=b4,
                g1=g1, be1=be1, m1=m1, v1=v1,
                g2=g2, be2=be2, m2=m2, v2=v2,
                g3=g3, be3=be3, m3=m3, v3=v3)


def _fold_bn(gamma, beta, mean, var, eps=BN_EPS):
    s = gamma / jnp.sqrt(var + eps)
    t = beta - mean * s
    return s, t


def fold_and_pad_params(raw, weight_dtype=jnp.float32):
    """Fold eval-mode BN into the following Linear layer, then pad everything to 128 lanes.

    Use weight_dtype=jnp.bfloat16 on v6e/v7x for the bf16 MXU path (f32 accumulation).
    """
    s1, t1 = _fold_bn(raw["g1"], raw["be1"], raw["m1"], raw["v1"])
    s2, t2 = _fold_bn(raw["g2"], raw["be2"], raw["m2"], raw["v2"])
    s3, t3 = _fold_bn(raw["g3"], raw["be3"], raw["m3"], raw["v3"])

    w1, b1 = raw["w1"], raw["b1"]
    w2 = raw["w2"] * s1[:, None]
    b2 = raw["b2"] + t1 @ raw["w2"]
    w3 = raw["w3"] * s2[:, None]
    b3 = raw["b3"] + t2 @ raw["w3"]
    w4 = raw["w4"] * s3[:, None]
    b4 = raw["b4"] + t3 @ raw["w4"]

    def pad_w(w):
        return jnp.pad(w, ((0, LANES - w.shape[0]),
                           (0, LANES - w.shape[1]))).astype(weight_dtype)

    def pad_b(b):
        return jnp.pad(b, (0, LANES - b.shape[0])).reshape(1, LANES).astype(jnp.float32)

    return dict(w1=pad_w(w1), b1=pad_b(b1),
                w2=pad_w(w2), b2=pad_b(b2),
                w3=pad_w(w3), b3=pad_b(b3),
                w4=pad_w(w4), b4=pad_b(b4))


# ---------------------------------------------------------------------------
# Pure-JAX reference of the unfolded eval-mode forward (matches PyTorch eval()).
# ---------------------------------------------------------------------------
def reference_forward(x, raw):
    def bn(h, g, b, m, v):
        return (h - m) / jnp.sqrt(v + BN_EPS) * g + b

    h = jnp.maximum(x @ raw["w1"] + raw["b1"], 0.0)
    h = bn(h, raw["g1"], raw["be1"], raw["m1"], raw["v1"])
    h = jnp.maximum(h @ raw["w2"] + raw["b2"], 0.0)
    h = bn(h, raw["g2"], raw["be2"], raw["m2"], raw["v2"])
    h = jnp.maximum(h @ raw["w3"] + raw["b3"], 0.0)
    h = bn(h, raw["g3"], raw["be3"], raw["m3"], raw["v3"])
    return jax.nn.sigmoid(h @ raw["w4"] + raw["b4"])


if __name__ == "__main__":
    key = jax.random.PRNGKey(0)
    kx, kp = jax.random.split(key)

    # Small deterministic example consistent with the module: [batch, input_dim].
    batch, input_dim = 64, 16
    x = jax.random.normal(kx, (batch, input_dim), jnp.float32)

    raw = make_raw_params(input_dim, kp)
    params = fold_and_pad_params(raw, weight_dtype=jnp.float32)

    # tile_b=32 -> 2 batch-grid steps (exercises the pipelined, megacore-parallel grid).
    out = experimental_net_forward(x, params, tile_b=32)
    out = jax.block_until_ready(out)

    ref = reference_forward(x, raw)
    assert out.shape == (batch, 1), out.shape
    assert jnp.allclose(out, ref, atol=1e-5, rtol=1e-5), (
        float(jnp.max(jnp.abs(out - ref))))

    print("KERNEL_OK")
</pallas_src>

<mosaic_0001>
module attributes {stable_mosaic.version = 11 : i64} {
  func.func @_mlp_kernel(%arg0: i32, %arg1: memref<32x128xf32, #tpu.memory_space<vmem>>, %arg2: memref<128x128xf32, #tpu.memory_space<vmem>>, %arg3: memref<1x128xf32, #tpu.memory_space<vmem>>, %arg4: memref<128x128xf32, #tpu.memory_space<vmem>>, %arg5: memref<1x128xf32, #tpu.memory_space<vmem>>, %arg6: memref<128x128xf32, #tpu.memory_space<vmem>>, %arg7: memref<1x128xf32, #tpu.memory_space<vmem>>, %arg8: memref<128x128xf32, #tpu.memory_space<vmem>>, %arg9: memref<1x128xf32, #tpu.memory_space<vmem>>, %arg10: memref<32x128xf32, #tpu.memory_space<vmem>>) attributes {dimension_semantics = [#tpu.dimension_semantics<parallel>], iteration_bounds = array<i64: 2>, scalar_prefetch = 0 : i64, scratch_operands = 0 : i64, tpu.core_type = #tpu.core_type<tc>, window_params = [{transform_indices = @transform_0, window_bounds = array<i64: 32, 128>}, {pipeline_mode = #tpu.pipeline_mode<synchronous>, transform_indices = @transform_1, window_bounds = array<i64: 128, 128>}, {pipeline_mode = #tpu.pipeline_mode<synchronous>, transform_indices = @transform_2, window_bounds = array<i64: 1, 128>}, {pipeline_mode = #tpu.pipeline_mode<synchronous>, transform_indices = @transform_3, window_bounds = array<i64: 128, 128>}, {pipeline_mode = #tpu.pipeline_mode<synchronous>, transform_indices = @transform_4, window_bounds = array<i64: 1, 128>}, {pipeline_mode = #tpu.pipeline_mode<synchronous>, transform_indices = @transform_5, window_bounds = array<i64: 128, 128>}, {pipeline_mode = #tpu.pipeline_mode<synchronous>, transform_indices = @transform_6, window_bounds = array<i64: 1, 128>}, {pipeline_mode = #tpu.pipeline_mode<synchronous>, transform_indices = @transform_7, window_bounds = array<i64: 128, 128>}, {pipeline_mode = #tpu.pipeline_mode<synchronous>, transform_indices = @transform_8, window_bounds = array<i64: 1, 128>}, {transform_indices = @transform_9, window_bounds = array<i64: 32, 128>}]} {
    %c0 = arith.constant 0 : index
    %c0_0 = arith.constant 0 : index
    %0 = vector.load %arg1[%c0, %c0_0] : memref<32x128xf32, #tpu.memory_space<vmem>>, vector<32x128xf32>
    %c0_1 = arith.constant 0 : index
    %c0_2 = arith.constant 0 : index
    %1 = vector.load %arg2[%c0_1, %c0_2] : memref<128x128xf32, #tpu.memory_space<vmem>>, vector<128x128xf32>
    %cst = arith.constant dense<0.000000e+00> : vector<32x128xf32>
    %2 = tpu.matmul %0, %1, %cst {dimension_numbers = #tpu.dot_dimension_numbers<[1], [0], [0], [1], [0, 0, 1, 1], [], []>} : vector<32x128xf32>, vector<128x128xf32>, vector<32x128xf32> -> vector<32x128xf32>
    %c0_3 = arith.constant 0 : index
    %c0_4 = arith.constant 0 : index
    %3 = vector.load %arg3[%c0_3, %c0_4] : memref<1x128xf32, #tpu.memory_space<vmem>>, vector<1x128xf32>
    %4 = vector.broadcast %3 : vector<1x128xf32> to vector<32x128xf32>
    %5 = arith.addf %2, %4 : vector<32x128xf32>
    %cst_5 = arith.constant 0.000000e+00 : f32
    %6 = vector.broadcast %cst_5 : f32 to vector<32x128xf32>
    %7 = arith.maximumf %5, %6 : vector<32x128xf32>
    %c0_6 = arith.constant 0 : index
    %c0_7 = arith.constant 0 : index
    %8 = vector.load %arg4[%c0_6, %c0_7] : memref<128x128xf32, #tpu.memory_space<vmem>>, vector<128x128xf32>
    %cst_8 = arith.constant dense<0.000000e+00> : vector<32x128xf32>
    %9 = tpu.matmul %7, %8, %cst_8 {dimension_numbers = #tpu.dot_dimension_numbers<[1], [0], [0], [1], [0, 0, 1, 1], [], []>} : vector<32x128xf32>, vector<128x128xf32>, vector<32x128xf32> -> vector<32x128xf32>
    %c0_9 = arith.constant 0 : index
    %c0_10 = arith.constant 0 : index
    %10 = vector.load %arg5[%c0_9, %c0_10] : memref<1x128xf32, #tpu.memory_space<vmem>>, vector<1x128xf32>
    %11 = vector.broadcast %10 : vector<1x128xf32> to vector<32x128xf32>
    %12 = arith.addf %9, %11 : vector<32x128xf32>
    %cst_11 = arith.constant 0.000000e+00 : f32
    %13 = vector.broadcast %cst_11 : f32 to vector<32x128xf32>
    %14 = arith.maximumf %12, %13 : vector<32x128xf32>
    %c0_12 = arith.constant 0 : index
    %c0_13 = arith.constant 0 : index
    %15 = vector.load %arg6[%c0_12, %c0_13] : memref<128x128xf32, #tpu.memory_space<vmem>>, vector<128x128xf32>
    %cst_14 = arith.constant dense<0.000000e+00> : vector<32x128xf32>
    %16 = tpu.matmul %14, %15, %cst_14 {dimension_numbers = #tpu.dot_dimension_numbers<[1], [0], [0], [1], [0, 0, 1, 1], [], []>} : vector<32x128xf32>, vector<128x128xf32>, vector<32x128xf32> -> vector<32x128xf32>
    %c0_15 = arith.constant 0 : index
    %c0_16 = arith.constant 0 : index
    %17 = vector.load %arg7[%c0_15, %c0_16] : memref<1x128xf32, #tpu.memory_space<vmem>>, vector<1x128xf32>
    %18 = vector.broadcast %17 : vector<1x128xf32> to vector<32x128xf32>
    %19 = arith.addf %16, %18 : vector<32x128xf32>
    %cst_17 = arith.constant 0.000000e+00 : f32
    %20 = vector.broadcast %cst_17 : f32 to vector<32x128xf32>
    %21 = arith.maximumf %19, %20 : vector<32x128xf32>
    %c0_18 = arith.constant 0 : index
    %c0_19 = arith.constant 0 : index
    %22 = vector.load %arg8[%c0_18, %c0_19] : memref<128x128xf32, #tpu.memory_space<vmem>>, vector<128x128xf32>
    %cst_20 = arith.constant dense<0.000000e+00> : vector<32x128xf32>
    %23 = tpu.matmul %21, %22, %cst_20 {dimension_numbers = #tpu.dot_dimension_numbers<[1], [0], [0], [1], [0, 0, 1, 1], [], []>} : vector<32x128xf32>, vector<128x128xf32>, vector<32x128xf32> -> vector<32x128xf32>
    %c0_21 = arith.constant 0 : index
    %c0_22 = arith.constant 0 : index
    %24 = vector.load %arg9[%c0_21, %c0_22] : memref<1x128xf32, #tpu.memory_space<vmem>>, vector<1x128xf32>
    %25 = vector.broadcast %24 : vector<1x128xf32> to vector<32x128xf32>
    %26 = arith.addf %23, %25 : vector<32x128xf32>
    %27 = math.absf %26 : vector<32x128xf32>
    %cst_23 = arith.constant 0.000000e+00 : f32
    %28 = vector.broadcast %cst_23 : f32 to vector<32x128xf32>
    %29 = arith.subf %28, %27 : vector<32x128xf32>
    %30 = math.exp %29 : vector<32x128xf32>
    %cst_24 = arith.constant 1.000000e+00 : f32
    %31 = vector.broadcast %cst_24 : f32 to vector<32x128xf32>
    %32 = arith.addf %31, %30 : vector<32x128xf32>
    %cst_25 = arith.constant 1.000000e+00 : f32
    %33 = vector.broadcast %cst_25 : f32 to vector<32x128xf32>
    %34 = arith.divf %33, %32 : vector<32x128xf32>
    %cst_26 = arith.constant 0.000000e+00 : f32
    %35 = vector.broadcast %cst_26 : f32 to vector<32x128xf32>
    %36 = arith.cmpf oge, %26, %35 : vector<32x128xf32>
    %37 = arith.mulf %30, %34 : vector<32x128xf32>
    %38 = arith.select %36, %34, %37 : vector<32x128xi1>, vector<32x128xf32>
    %c0_27 = arith.constant 0 : index
    %c0_28 = arith.constant 0 : index
    %39 = vector.load %arg10[%c0_27, %c0_28] : memref<32x128xf32, #tpu.memory_space<vmem>>, vector<32x128xf32>
    tpu.vector_store %arg10[%c0_27, %c0_28], %38 {strides = array<i32>} : memref<32x128xf32, #tpu.memory_space<vmem>>, vector<32x128xf32>,
    return
  }
  func.func @transform_0(%arg0: i32) -> (i32, i32) {
    %c0_i32 = arith.constant 0 : i32
    %c0_i32_0 = arith.constant 0 : i32
    return %arg0, %c0_i32 : i32, i32
  }
  func.func @transform_1(%arg0: i32) -> (i32, i32) {
    %c0_i32 = arith.constant 0 : i32
    %c0_i32_0 = arith.constant 0 : i32
    %c0_i32_1 = arith.constant 0 : i32
    return %c0_i32, %c0_i32_0 : i32, i32
  }
  func.func @transform_2(%arg0: i32) -> (i32, i32) {
    %c0_i32 = arith.constant 0 : i32
    %c0_i32_0 = arith.constant 0 : i32
    %c0_i32_1 = arith.constant 0 : i32
    return %c0_i32, %c0_i32_0 : i32, i32
  }
  func.func @transform_3(%arg0: i32) -> (i32, i32) {
    %c0_i32 = arith.constant 0 : i32
    %c0_i32_0 = arith.constant 0 : i32
    %c0_i32_1 = arith.constant 0 : i32
    return %c0_i32, %c0_i32_0 : i32, i32
  }
  func.func @transform_4(%arg0: i32) -> (i32, i32) {
    %c0_i32 = arith.constant 0 : i32
    %c0_i32_0 = arith.constant 0 : i32
    %c0_i32_1 = arith.constant 0 : i32
    return %c0_i32, %c0_i32_0 : i32, i32
  }
  func.func @transform_5(%arg0: i32) -> (i32, i32) {
    %c0_i32 = arith.constant 0 : i32
    %c0_i32_0 = arith.constant 0 : i32
    %c0_i32_1 = arith.constant 0 : i32
    return %c0_i32, %c0_i32_0 : i32, i32
  }
  func.func @transform_6(%arg0: i32) -> (i32, i32) {
    %c0_i32 = arith.constant 0 : i32
    %c0_i32_0 = arith.constant 0 : i32
    %c0_i32_1 = arith.constant 0 : i32
    return %c0_i32, %c0_i32_0 : i32, i32
  }
  func.func @transform_7(%arg0: i32) -> (i32, i32) {
    %c0_i32 = arith.constant 0 : i32
    %c0_i32_0 = arith.constant 0 : i32
    %c0_i32_1 = arith.constant 0 : i32
    return %c0_i32, %c0_i32_0 : i32, i32
  }
  func.func @transform_8(%arg0: i32) -> (i32, i32) {
    %c0_i32 = arith.constant 0 : i32
    %c0_i32_0 = arith.constant 0 : i32
    %c0_i32_1 = arith.constant 0 : i32
    return %c0_i32, %c0_i32_0 : i32, i32
  }
  func.func @transform_9(%arg0: i32) -> (i32, i32) {
    %c0_i32 = arith.constant 0 : i32
    %c0_i32_0 = arith.constant 0 : i32
    return %arg0, %c0_i32 : i32, i32
  }
}

</mosaic_0001>

<llo_original>
// kernel: experimental_net_forward.1
$region0: #{experimental_net_forward.1}
  #allocation0 [shape = 'u32[]', space=smem, size = 0x4, offset = 0x4, fixed_abs, tag = 'smem constant byte address 0x4 - core index']
  #allocation1 [shape = 'u32[144,128]{1,0:T(1,128)}', space=vmem, size = 0x12000, scoped, tag = 'internal scratch']
  %s0 = inlined_call_operand.vmem [shape: f32[64,128], index: 0, kind: input, shape index: {}]
  %s1 = inlined_call_operand.vmem [shape: f32[128,128], index: 1, kind: input, shape index: {}]
  %s2 = inlined_call_operand.vmem [shape: f32[1,128], index: 2, kind: input, shape index: {}]
  %s3 = inlined_call_operand.hbm [shape: f32[128,128], index: 3, kind: input, shape index: {}]
  %s4 = inlined_call_operand.vmem [shape: f32[1,128], index: 4, kind: input, shape index: {}]
  %s5 = inlined_call_operand.hbm [shape: f32[128,128], index: 5, kind: input, shape index: {}]
  %s6 = inlined_call_operand.vmem [shape: f32[1,128], index: 6, kind: input, shape index: {}]
  %s7 = inlined_call_operand.hbm [shape: f32[128,128], index: 7, kind: input, shape index: {}]
  %s8 = inlined_call_operand.vmem [shape: f32[1,128], index: 8, kind: input, shape index: {}]
  %s9 = inlined_call_operand.vmem [shape: f32[64,128], index: 9, kind: output, shape index: {}]
  %s10 = sld [smem:[#allocation0]]
  $region81: #{experimental_net_forward.1} parent=0
    _
  %s12 = ssub.s32 1, %s10
  %s13 = scalar_select 0, %s12, %s10
  $region1: #{experimental_net_forward.1} parent=0
    #allocation2 [shape = 'u8[65536]{0}', space=vmem, size = 0x10000, scoped, tag = 'input window, operand 3, single buffered']
    #allocation3 [shape = 's32[2]{0}', space=sflag, size = 0x8, scoped, tag = 'scoped memory for experimental_net_forward.1']
    #allocation4 [shape = 'u8[65536]{0}', space=vmem, size = 0x10000, scoped, tag = 'input window, operand 5, single buffered']
    #allocation5 [shape = 's32[1]{0}', space=sflag, size = 0x4, scoped, tag = 'scoped memory for experimental_net_forward.1']
    #allocation6 [shape = 'u8[65536]{0}', space=vmem, size = 0x10000, scoped, tag = 'input window, operand 7, single buffered']
    %14 = vsyncpa [#allocation3], 0
    %15 = vsyncpa [#allocation5], 0
    loop: start=0, step=1, limit=4
    $region2: #{experimental_net_forward.1} parent=1 // loop_pre_header
      _
    $region3: #{experimental_net_forward.1} parent=1 // loop_header
      %s17 = sphi 0, %s21
      %p18 = scmp.ge.s32.totalorder %s17, 4
      %s27 = sphi 0, %s29
      %s30 = sphi 0, %s27
      %s31 = sphi 0, %s30
      %s47 = sphi 0, %s31
      %s51 = sphi 0, %s51
      %s53 = sphi 0, %s51
      %s54 = sphi 0, %s53
      %s68 = sphi 0, %s54
      %s72 = sphi 0, %s72
      %s74 = sphi 0, %s72
      %s75 = sphi 0, %s74
      %s89 = sphi 0, %s75
      %s93 = sphi 0, %s93
      %s95 = sphi 0, %s93
      %s96 = sphi 0, %s95
      %s110 = sphi 0, %s96
      %s114 = sphi 0, %s114
      %s116 = sphi 0, %s114
      %s117 = sphi 0, %s116
      %s131 = sphi 0, %s117
      %s135 = sphi 0, %s135
      %s137 = sphi 0, %s135
      %s138 = sphi 0, %s137
      %s152 = sphi 0, %s138
      %s156 = sphi 0, %s156
      %s158 = sphi 0, %s156
      %s159 = sphi 0, %s158
      %s173 = sphi 0, %s159
      %s177 = sphi 0, %s177
      %s179 = sphi 0, %s177
      %s180 = sphi 0, %s179
      %s194 = sphi 0, %s180
      %s198 = sphi 0, %s198
      %s200 = sphi 0, %s198
      %s201 = sphi 0, %s200
      %s215 = sphi 0, %s201
      %s221 = sphi 0, %s223
      %s224 = sphi 0, %s221
      %s225 = sphi 0, %s224
      %s241 = sphi 0, %s225
    $region4: #{experimental_net_forward.1} parent=1 // loop_header_branch
      %20 = sbr.rel (%p18) target = $region8
    $region5: #{experimental_net_forward.1} parent=1 // loop_body
      %s22 = ssub.s32 %s17, 1
      %s23 = ssub.s32 %s17, 2
      %s24 = sadd.s32 %s17, 1
      %s25 = ssub.s32 %s17, %s24
      %p26 = scmp.eq.s32.totalorder %s25, 0
      %s28 = sadd.s32 %s27, 1
      %s29 = scalar_select %p26, %s27, %s28
      %p32 = pneg %p26
      %p33 = scmp.eq.s32.totalorder %s17, 1
      %p34 = por %p32, %p33
      %p35 = scmp.ne.s32.totalorder %s27, %s30
      %p36 = scmp.eq.s32.totalorder %s17, 0
      %p37 = por %p35, %p36
      %p38 = scmp.ne.s32.totalorder %s27, %s30
      %p39 = scmp.eq.s32.totalorder %s22, 1
      %p40 = por %p38, %p39
      %p41 = scmp.ne.s32.totalorder %s30, %s31
      %p42 = scmp.eq.s32.totalorder %s22, 0
      %p43 = por %p41, %p42
      %p44 = scmp.ne.s32.totalorder %s30, %s31
      %p45 = scmp.eq.s32.totalorder %s23, 1
      %p46 = por %p44, %p45
      %p48 = scmp.ne.s32.totalorder %s31, %s47
      %p49 = scmp.eq.s32.totalorder %s23, 0
      %p50 = por %p48, %p49
      %s52 = sadd.s32 %s51, 1
      %p55 = scmp.eq.s32.totalorder %s17, 1
      %p56 = scmp.ne.s32.totalorder %s51, %s53
      %p57 = scmp.eq.s32.totalorder %s17, 0
      %p58 = por %p56, %p57
      %p59 = scmp.ne.s32.totalorder %s51, %s53
      %p60 = scmp.eq.s32.totalorder %s22, 1
      %p61 = por %p59, %p60
      %p62 = scmp.ne.s32.totalorder %s53, %s54
      %p63 = scmp.eq.s32.totalorder %s22, 0
      %p64 = por %p62, %p63
      %p65 = scmp.ne.s32.totalorder %s53, %s54
      %p66 = scmp.eq.s32.totalorder %s23, 1
      %p67 = por %p65, %p66
      %p69 = scmp.ne.s32.totalorder %s54, %s68
      %p70 = scmp.eq.s32.totalorder %s23, 0
      %p71 = por %p69, %p70
      %s73 = sadd.s32 %s72, 1
      %p76 = scmp.eq.s32.totalorder %s17, 1
      %p77 = scmp.ne.s32.totalorder %s72, %s74
      %p78 = scmp.eq.s32.totalorder %s17, 0
      %p79 = por %p77, %p78
      %p80 = scmp.ne.s32.totalorder %s72, %s74
      %p81 = scmp.eq.s32.totalorder %s22, 1
      %p82 = por %p80, %p81
      %p83 = scmp.ne.s32.totalorder %s74, %s75
      %p84 = scmp.eq.s32.totalorder %s22, 0
      %p85 = por %p83, %p84
      %p86 = scmp.ne.s32.totalorder %s74, %s75
      %p87 = scmp.eq.s32.totalorder %s23, 1
      %p88 = por %p86, %p87
      %p90 = scmp.ne.s32.totalorder %s75, %s89
      %p91 = scmp.eq.s32.totalorder %s23, 0
      %p92 = por %p90, %p91
      %s94 = sadd.s32 %s93, 1
      %p97 = scmp.eq.s32.totalorder %s17, 1
      %p98 = scmp.ne.s32.totalorder %s93, %s95
      %p99 = scmp.eq.s32.totalorder %s17, 0
      %p100 = por %p98, %p99
      %p101 = scmp.ne.s32.totalorder %s93, %s95
      %p102 = scmp.eq.s32.totalorder %s22, 1
      %p103 = por %p101, %p102
      %p104 = scmp.ne.s32.totalorder %s95, %s96
      %p105 = scmp.eq.s32.totalorder %s22, 0
      %p106 = por %p104, %p105
      %p107 = scmp.ne.s32.totalorder %s95, %s96
      %p108 = scmp.eq.s32.totalorder %s23, 1
      %p109 = por %p107, %p108
      %p111 = scmp.ne.s32.totalorder %s96, %s110
      %p112 = scmp.eq.s32.totalorder %s23, 0
      %p113 = por %p111, %p112
      %s115 = sadd.s32 %s114, 1
      %p118 = scmp.eq.s32.totalorder %s17, 1
      %p119 = scmp.ne.s32.totalorder %s114, %s116
      %p120 = scmp.eq.s32.totalorder %s17, 0
      %p121 = por %p119, %p120
      %p122 = scmp.ne.s32.totalorder %s114, %s116
      %p123 = scmp.eq.s32.totalorder %s22, 1
      %p124 = por %p122, %p123
      %p125 = scmp.ne.s32.totalorder %s116, %s117
      %p126 = scmp.eq.s32.totalorder %s22, 0
      %p127 = por %p125, %p126
      %p128 = scmp.ne.s32.totalorder %s116, %s117
      %p129 = scmp.eq.s32.totalorder %s23, 1
      %p130 = por %p128, %p129
      %p132 = scmp.ne.s32.totalorder %s117, %s131
      %p133 = scmp.eq.s32.totalorder %s23, 0
      %p134 = por %p132, %p133
      %s136 = sadd.s32 %s135, 1
      %p139 = scmp.eq.s32.totalorder %s17, 1
      %p140 = scmp.ne.s32.totalorder %s135, %s137
      %p141 = scmp.eq.s32.totalorder %s17, 0
      %p142 = por %p140, %p141
      %p143 = scmp.ne.s32.totalorder %s135, %s137
      %p144 = scmp.eq.s32.totalorder %s22, 1
      %p145 = por %p143, %p144
      %p146 = scmp.ne.s32.totalorder %s137, %s138
      %p147 = scmp.eq.s32.totalorder %s22, 0
      %p148 = por %p146, %p147
      %p149 = scmp.ne.s32.totalorder %s137, %s138
      %p150 = scmp.eq.s32.totalorder %s23, 1
      %p151 = por %p149, %p150
      %p153 = scmp.ne.s32.totalorder %s138, %s152
      %p154 = scmp.eq.s32.totalorder %s23, 0
      %p155 = por %p153, %p154
      %s157 = sadd.s32 %s156, 1
      %p160 = scmp.eq.s32.totalorder %s17, 1
      %p161 = scmp.ne.s32.totalorder %s156, %s158
      %p162 = scmp.eq.s32.totalorder %s17, 0
      %p163 = por %p161, %p162
      %p164 = scmp.ne.s32.totalorder %s156, %s158
      %p165 = scmp.eq.s32.totalorder %s22, 1
      %p166 = por %p164, %p165
      %p167 = scmp.ne.s32.totalorder %s158, %s159
      %p168 = scmp.eq.s32.totalorder %s22, 0
      %p169 = por %p167, %p168
      %p170 = scmp.ne.s32.totalorder %s158, %s159
      %p171 = scmp.eq.s32.totalorder %s23, 1
      %p172 = por %p170, %p171
      %p174 = scmp.ne.s32.totalorder %s159, %s173
      %p175 = scmp.eq.s32.totalorder %s23, 0
      %p176 = por %p174, %p175
      %s178 = sadd.s32 %s177, 1
      %p181 = scmp.eq.s32.totalorder %s17, 1
      %p182 = scmp.ne.s32.totalorder %s177, %s179
      %p183 = scmp.eq.s32.totalorder %s17, 0
      %p184 = por %p182, %p183
      %p185 = scmp.ne.s32.totalorder %s177, %s179
      %p186 = scmp.eq.s32.totalorder %s22, 1
      %p187 = por %p185, %p186
      %p188 = scmp.ne.s32.totalorder %s179, %s180
      %p189 = scmp.eq.s32.totalorder %s22, 0
      %p190 = por %p188, %p189
      %p191 = scmp.ne.s32.totalorder %s179, %s180
      %p192 = scmp.eq.s32.totalorder %s23, 1
      %p193 = por %p191, %p192
      %p195 = scmp.ne.s32.totalorder %s180, %s194
      %p196 = scmp.eq.s32.totalorder %s23, 0
      %p197 = por %p195, %p196
      %s199 = sadd.s32 %s198, 1
      %p202 = scmp.eq.s32.totalorder %s17, 1
      %p203 = scmp.ne.s32.totalorder %s198, %s200
      %p204 = scmp.eq.s32.totalorder %s17, 0
      %p205 = por %p203, %p204
      %p206 = scmp.ne.s32.totalorder %s198, %s200
      %p207 = scmp.eq.s32.totalorder %s22, 1
      %p208 = por %p206, %p207
      %p209 = scmp.ne.s32.totalorder %s200, %s201
      %p210 = scmp.eq.s32.totalorder %s22, 0
      %p211 = por %p209, %p210
      %p212 = scmp.ne.s32.totalorder %s200, %s201
      %p213 = scmp.eq.s32.totalorder %s23, 1
      %p214 = por %p212, %p213
      %p216 = scmp.ne.s32.totalorder %s201, %s215
      %p217 = scmp.eq.s32.totalorder %s23, 0
      %p218 = por %p216, %p217
      %s219 = ssub.s32 %s17, %s24
      %p220 = scmp.eq.s32.totalorder %s219, 0
      %s222 = sadd.s32 %s221, 1
      %s223 = scalar_select %p220, %s221, %s222
      %p226 = pneg %p220
      %p227 = scmp.eq.s32.totalorder %s17, 1
      %p228 = por %p226, %p227
      %p229 = scmp.ne.s32.totalorder %s221, %s224
      %p230 = scmp.eq.s32.totalorder %s17, 0
      %p231 = por %p229, %p230
      %p232 = scmp.ne.s32.totalorder %s221, %s224
      %p233 = scmp.eq.s32.totalorder %s22, 1
      %p234 = por %p232, %p233
      %p235 = scmp.ne.s32.totalorder %s224, %s225
      %p236 = scmp.eq.s32.totalorder %s22, 0
      %p237 = por %p235, %p236
      %p238 = scmp.ne.s32.totalorder %s224, %s225
      %p239 = scmp.eq.s32.totalorder %s23, 1
      %p240 = por %p238, %p239
      %p242 = scmp.ne.s32.totalorder %s225, %s241
      %p243 = scmp.eq.s32.totalorder %s23, 0
      %p244 = por %p242, %p243
      %p245 = scmp.le.s32.totalorder 1, %s17
      %p246 = scmp.lt.s32.totalorder %s17, 3
      %p247 = pnand %p245, %p246
      %p248 = pneg %p247
      // Predicated region
      $region9: #{experimental_net_forward.1} parent=5 // pred_check
        _
      $region10: #{experimental_net_forward.1} parent=5 // pred_check_branch
        %250 = sbr.rel (%p247) target = $region12
      $region11: #{experimental_net_forward.1} parent=5 // pred_region
        %s251 = ssub.s32 %s17, 1
        // Predicated region
        $region13: #{experimental_net_forward.1} parent=11 // pred_check
          %p252 = pneg %p64
        $region14: #{experimental_net_forward.1} parent=11 // pred_check_branch
          %254 = sbr.rel (%p252) target = $region16
        $region15: #{experimental_net_forward.1} parent=11 // pred_region
          _
        $region16: #{experimental_net_forward.1} parent=11 // pred_fallthru
          _
        // Predicated region
        $region17: #{experimental_net_forward.1} parent=11 // pred_check
          %p255 = pneg %p85
        $region18: #{experimental_net_forward.1} parent=11 // pred_check_branch
          %257 = sbr.rel (%p255) target = $region20
        $region19: #{experimental_net_forward.1} parent=11 // pred_region
          _
        $region20: #{experimental_net_forward.1} parent=11 // pred_fallthru
          _
        // Predicated region
        $region21: #{experimental_net_forward.1} parent=11 // pred_check
          %p258 = pneg %p106
        $region22: #{experimental_net_forward.1} parent=11 // pred_check_branch
          %260 = sbr.rel (%p258) target = $region24
        $region23: #{experimental_net_forward.1} parent=11 // pred_region
          %s262 = ssub.s32 2048, 2048
          %263 = vsyncadd [#allocation3], %s262
          %s264 = sshll.u32 [#allocation2], 4
          %s265 = int_to_ptr.vmem [resolvable:$true] %s264
          %270 = dma.hbm_to_vmem [thread:$0]  %s3, 2048, %s265, [#allocation3], 128, 128, 8
        $region24: #{experimental_net_forward.1} parent=11 // pred_fallthru
          _
        // Predicated region
        $region25: #{experimental_net_forward.1} parent=11 // pred_check
          %p271 = pneg %p127
        $region26: #{experimental_net_forward.1} parent=11 // pred_check_branch
          %273 = sbr.rel (%p271) target = $region28
        $region27: #{experimental_net_forward.1} parent=11 // pred_region
          _
        $region28: #{experimental_net_forward.1} parent=11 // pred_fallthru
          _
        // Predicated region
        $region29: #{experimental_net_forward.1} parent=11 // pred_check
          %p274 = pneg %p148
        $region30: #{experimental_net_forward.1} parent=11 // pred_check_branch
          %276 = sbr.rel (%p274) target = $region32
        $region31: #{experimental_net_forward.1} parent=11 // pred_region
          %s278 = ssub.s32 2048, 2048
          %279 = vsyncadd [#allocation5], %s278
          %s280 = sshll.u32 [#allocation4], 4
          %s281 = int_to_ptr.vmem [resolvable:$true] %s280
          %286 = dma.hbm_to_vmem [thread:$0]  %s5, 2048, %s281, [#allocation5], 128, 128, 8
        $region32: #{experimental_net_forward.1} parent=11 // pred_fallthru
          _
        // Predicated region
        $region33: #{experimental_net_forward.1} parent=11 // pred_check
          %p287 = pneg %p169
        $region34: #{experimental_net_forward.1} parent=11 // pred_check_branch
          %289 = sbr.rel (%p287) target = $region36
        $region35: #{experimental_net_forward.1} parent=11 // pred_region
          _
        $region36: #{experimental_net_forward.1} parent=11 // pred_fallthru
          _
        // Predicated region
        $region37: #{experimental_net_forward.1} parent=11 // pred_check
          %p290 = pneg %p190
        $region38: #{experimental_net_forward.1} parent=11 // pred_check_branch
          %292 = sbr.rel (%p290) target = $region40
        $region39: #{experimental_net_forward.1} parent=11 // pred_region
          %s294 = ssub.s32 2048, 2048
          %295 = vsyncadd [#allocation5], %s294
          %s296 = sshll.u32 [#allocation6], 4
          %s297 = int_to_ptr.vmem [resolvable:$true] %s296
          %302 = dma.hbm_to_vmem [thread:$0]  %s7, 2048, %s297, [#allocation5], 128, 128, 8
        $region40: #{experimental_net_forward.1} parent=11 // pred_fallthru
          _
        // Predicated region
        $region41: #{experimental_net_forward.1} parent=11 // pred_check
          %p303 = pneg %p211
        $region42: #{experimental_net_forward.1} parent=11 // pred_check_branch
          %305 = sbr.rel (%p303) target = $region44
        $region43: #{experimental_net_forward.1} parent=11 // pred_region
          _
        $region44: #{experimental_net_forward.1} parent=11 // pred_fallthru
          _
      $region12: #{experimental_net_forward.1} parent=5 // pred_fallthru
        _
      %p306 = scmp.lt.s32.totalorder %s17, 2
      // Predicated region
      $region45: #{experimental_net_forward.1} parent=5 // pred_check
        %p307 = pneg %p306
      $region46: #{experimental_net_forward.1} parent=5 // pred_check_branch
        %309 = sbr.rel (%p307) target = $region48
      $region47: #{experimental_net_forward.1} parent=5 // pred_region
        // Predicated region
        $region49: #{experimental_net_forward.1} parent=47 // pred_check
          %p310 = pneg %p37
        $region50: #{experimental_net_forward.1} parent=47 // pred_check_branch
          %312 = sbr.rel (%p310) target = $region52
        $region51: #{experimental_net_forward.1} parent=47 // pred_region
          %s313 = smul.u32 4, %s17
          %p314 = scmp.lt.s32.totalorder %s313, 7
          %s315 = scalar_select %p314, %s313, 7
          %s316 = smul.addr %s315, 8
          %s317 = scalar_lea.vmem %s0, %s316
          %s318 = smul.u32 4, %s17
        $region52: #{experimental_net_forward.1} parent=47 // pred_fallthru
          _
      $region48: #{experimental_net_forward.1} parent=5 // pred_fallthru
        _
      %p319 = scmp.le.s32.totalorder 1, %s17
      %p320 = scmp.lt.s32.totalorder %s17, 3
      %p321 = pnand %p319, %p320
      %p322 = pneg %p321
      // Predicated region
      $region53: #{experimental_net_forward.1} parent=5 // pred_check
        _
      $region54: #{experimental_net_forward.1} parent=5 // pred_check_branch
        %324 = sbr.rel (%p321) target = $region56
      $region55: #{experimental_net_forward.1} parent=5 // pred_region
        %s325 = ssub.s32 %s17, 1
        // Predicated region
        $region57: #{experimental_net_forward.1} parent=55 // pred_check
          %p326 = pneg %p106
        $region58: #{experimental_net_forward.1} parent=55 // pred_check_branch
          %328 = sbr.rel (%p326) target = $region60
        $region59: #{experimental_net_forward.1} parent=55 // pred_region
          %329 = dma.done [#allocation3], 2048
        $region60: #{experimental_net_forward.1} parent=55 // pred_fallthru
          _
        // Predicated region
        $region61: #{experimental_net_forward.1} parent=55 // pred_check
          %p330 = pneg %p148
        $region62: #{experimental_net_forward.1} parent=55 // pred_check_branch
          %332 = sbr.rel (%p330) target = $region64
        $region63: #{experimental_net_forward.1} parent=55 // pred_region
          %333 = dma.done [#allocation5], 2048
        $region64: #{experimental_net_forward.1} parent=55 // pred_fallthru
          _
        // Predicated region
        $region65: #{experimental_net_forward.1} parent=55 // pred_check
          %p334 = pneg %p190
        $region66: #{experimental_net_forward.1} parent=55 // pred_check_branch
          %336 = sbr.rel (%p334) target = $region68
        $region67: #{experimental_net_forward.1} parent=55 // pred_region
          %337 = dma.done [#allocation5], 2048
        $region68: #{experimental_net_forward.1} parent=55 // pred_fallthru
          _
        %s338 = smul.u32 4, %s22
        %p339 = scmp.lt.s32.totalorder %s338, 7
        %s340 = scalar_select %p339, %s338, 7
        %s341 = smul.addr %s340, 8
        %s342 = scalar_lea.vmem %s0, %s341
        %p343 = pneg %p43
        %p344 = pneg %p40
        %p345 = pneg %p64
        %p346 = pneg %p61
        %p347 = pneg %p85
        %p348 = pneg %p82
        %p349 = pneg %p106
        %p350 = pneg %p103
        %p351 = pneg %p127
        %p352 = pneg %p124
        %p353 = pneg %p148
        %p354 = pneg %p145
        %p355 = pneg %p169
        %p356 = pneg %p166
        %p357 = pneg %p190
        %p358 = pneg %p187
        %p359 = pneg %p211
        %p360 = pneg %p208
        %p361 = pneg %p237
        %p362 = pneg %p234
        %s363 = smul.u32 4, %s22
        %p364 = scmp.lt.s32.totalorder %s363, 7
        %s365 = scalar_select %p364, %s363, 7
        %s366 = smul.addr %s365, 8
        %s367 = scalar_lea.vmem %s9, %s366
        %s368 = smul.u32 4, %s22
        %p369 = scmp.lt.s32.totalorder %s368, 7
        %s370 = scalar_select %p369, %s368, 7
        %s371 = smul.addr %s370, 8
        %s372 = scalar_lea.vmem %s0, %s371
        %s373 = smul.u32 4, %s22
        %s374 = smul.u32 4, %s22
        %p375 = scmp.lt.s32.totalorder %s374, 7
        %s376 = scalar_select %p375, %s374, 7
        %s377 = smul.addr %s376, 8
        %s378 = scalar_lea.vmem %s9, %s377
        %s379 = smul.u32 4, %s22
        %v380 = vld [vmem:[%s372] sm:$0xff]
        %v381 = vld [vmem:[%s372 + $0x8] sm:$0xff]
        %v382 = vld [vmem:[%s372 + $0x10] sm:$0xff]
        %v383 = vld [vmem:[%s372 + $0x18] sm:$0xff]
        %v384 = vld [vmem:[%s1] sm:$0xff]
        %v385 = vld [vmem:[%s1 + $0x8] sm:$0xff]
        %v386 = vld [vmem:[%s1 + $0x10] sm:$0xff]
        %v387 = vld [vmem:[%s1 + $0x18] sm:$0xff]
        %v388 = vld [vmem:[%s1 + $0x20] sm:$0xff]
        %v389 = vld [vmem:[%s1 + $0x28] sm:$0xff]
        %v390 = vld [vmem:[%s1 + $0x30] sm:$0xff]
        %v391 = vld [vmem:[%s1 + $0x38] sm:$0xff]
        %v392 = vld [vmem:[%s1 + $0x40] sm:$0xff]
        %v393 = vld [vmem:[%s1 + $0x48] sm:$0xff]
        %v394 = vld [vmem:[%s1 + $0x50] sm:$0xff]
        %v395 = vld [vmem:[%s1 + $0x58] sm:$0xff]
        %v396 = vld [vmem:[%s1 + $0x60] sm:$0xff]
        %v397 = vld [vmem:[%s1 + $0x68] sm:$0xff]
        %v398 = vld [vmem:[%s1 + $0x70] sm:$0xff]
        %v399 = vld [vmem:[%s1 + $0x78] sm:$0xff]
        %v400 = vld [vmem:[%s2] sm:$0x1]
        %v402 = vlaneseq
        %v403 = vshrl.u32 %v402, 7
        %v404 = vsub.s32 0, %v403
        %v405 = vrot.slane %v400, %v404
        %407 = vmatprep.subr.mxu0 0.0
        %408 = vmatpush1.msra.mxu0 %v399
        %409 = vmatprep.subr.mxu0 0.0
        %410 = vmatpush1.msra.mxu0 %v398
        %411 = vmatprep.subr.mxu0 0.0
        %412 = vmatpush1.msra.mxu0 %v397
        %413 = vmatprep.subr.mxu0 0.0
        %414 = vmatpush1.msra.mxu0 %v396
        %415 = vmatprep.subr.mxu0 0.0
        %416 = vmatpush1.msra.mxu0 %v395
        %417 = vmatprep.subr.mxu0 0.0
        %418 = vmatpush1.msra.mxu0 %v394
        %419 = vmatprep.subr.mxu0 0.0
        %420 = vmatpush1.msra.mxu0 %v393
        %421 = vmatprep.subr.mxu0 0.0
        %422 = vmatpush1.msra.mxu0 %v392
        %423 = vmatprep.subr.mxu0 0.0
        %424 = vmatpush1.msra.mxu0 %v391
        %425 = vmatprep.subr.mxu0 0.0
        %426 = vmatpush1.msra.mxu0 %v390
        %427 = vmatprep.subr.mxu0 0.0
        %428 = vmatpush1.msra.mxu0 %v389
        %429 = vmatprep.subr.mxu0 0.0
        %430 = vmatpush1.msra.mxu0 %v388
        %431 = vmatprep.subr.mxu0 0.0
        %432 = vmatpush1.msra.mxu0 %v387
        %433 = vmatprep.subr.mxu0 0.0
        %434 = vmatpush1.msra.mxu0 %v386
        %435 = vmatprep.subr.mxu0 0.0
        %436 = vmatpush1.msra.mxu0 %v385
        %437 = vmatprep.subr.mxu0 0.0
        %438 = vmatpush1.msra.mxu0 %v384
        %439 = vmatprep.subr.mxu0 0.0
        %440 = vmatpush2.msra.mxu0 0.0
        %441 = vmatprep.subr.mxu0 0.0
        %442 = vmatpush2.msra.mxu0 0.0
        %443 = vmatprep.subr.mxu0 0.0
        %444 = vmatpush2.msra.mxu0 0.0
        %445 = vmatprep.subr.mxu0 0.0
        %446 = vmatpush2.msra.mxu0 0.0
        %447 = vmatprep.subr.mxu0 0.0
        %448 = vmatpush2.msra.mxu0 0.0
        %449 = vmatprep.subr.mxu0 0.0
        %450 = vmatpush2.msra.mxu0 0.0
        %451 = vmatprep.subr.mxu0 0.0
        %452 = vmatpush2.msra.mxu0 0.0
        %453 = vmatprep.subr.mxu0 0.0
        %454 = vmatpush2.msra.mxu0 0.0
        %455 = vmatprep.subr.mxu0 0.0
        %456 = vmatpush2.msra.mxu0 0.0
        %457 = vmatprep.subr.mxu0 0.0
        %458 = vmatpush2.msra.mxu0 0.0
        %459 = vmatprep.subr.mxu0 0.0
        %460 = vmatpush2.msra.mxu0 0.0
        %461 = vmatprep.subr.mxu0 0.0
        %462 = vmatpush2.msra.mxu0 0.0
        %463 = vmatprep.subr.mxu0 0.0
        %464 = vmatpush2.msra.mxu0 0.0
        %465 = vmatprep.subr.mxu0 0.0
        %466 = vmatpush2.msra.mxu0 0.0
        %467 = vmatprep.subr.mxu0 0.0
        %468 = vmatpush2.msra.mxu0 0.0
        %469 = vmatprep.subr.mxu0 0.0
        %470 = vmatpush2.msra.mxu0 0.0
        %471 = vmatprep.mubr.f32.mxu0 0.0
        %472 = vmatmul.mubr.f32.gmra.mxu0 %v380
        %v473 = vpop.f32.mrf.mxu0
        %v474 = vadd.f32 %v405, %v473
        %v475 = vpop.f32.mrf.mxu0
        %476 = vmatprep.mubr.f32.mxu0 0.0
        %477 = vmatmul.mubr.f32.gmra.mxu0 %v381
        %v478 = vpop.f32.mrf.mxu0
        %v479 = vadd.f32 %v405, %v478
        %v480 = vpop.f32.mrf.mxu0
        %481 = vmatprep.mubr.f32.mxu0 0.0
        %482 = vmatmul.mubr.f32.gmra.mxu0 %v382
        %v483 = vpop.f32.mrf.mxu0
        %v484 = vadd.f32 %v405, %v483
        %v485 = vpop.f32.mrf.mxu0
        %486 = vmatprep.mubr.f32.mxu0 0.0
        %487 = vmatmul.mubr.f32.gmra.mxu0 %v383
        %v488 = vpop.f32.mrf.mxu0
        %v489 = vadd.f32 %v405, %v488
        %v490 = vpop.f32.mrf.mxu0
        %491 = vdwg.mxu0
        %v492 = vmax.f32 %v474, 0.0
        %v493 = vmax.f32 %v479, 0.0
        %v494 = vmax.f32 %v484, 0.0
        %v495 = vmax.f32 %v489, 0.0
        %v496 = vld [vmem:[#allocation2] sm:$0xff]
        %v497 = vld [vmem:[#allocation2 + $0x8] sm:$0xff]
        %v498 = vld [vmem:[#allocation2 + $0x10] sm:$0xff]
        %v499 = vld [vmem:[#allocation2 + $0x18] sm:$0xff]
        %v500 = vld [vmem:[#allocation2 + $0x20] sm:$0xff]
        %v501 = vld [vmem:[#allocation2 + $0x28] sm:$0xff]
        %v502 = vld [vmem:[#allocation2 + $0x30] sm:$0xff]
        %v503 = vld [vmem:[#allocation2 + $0x38] sm:$0xff]
        %v504 = vld [vmem:[#allocation2 + $0x40] sm:$0xff]
        %v505 = vld [vmem:[#allocation2 + $0x48] sm:$0xff]
        %v506 = vld [vmem:[#allocation2 + $0x50] sm:$0xff]
        %v507 = vld [vmem:[#allocation2 + $0x58] sm:$0xff]
        %v508 = vld [vmem:[#allocation2 + $0x60] sm:$0xff]
        %v509 = vld [vmem:[#allocation2 + $0x68] sm:$0xff]
        %v510 = vld [vmem:[#allocation2 + $0x70] sm:$0xff]
        %v511 = vld [vmem:[#allocation2 + $0x78] sm:$0xff]
        %v512 = vld [vmem:[%s4] sm:$0x1]
        %v514 = vlaneseq
        %v515 = vshrl.u32 %v514, 7
        %v516 = vsub.s32 0, %v515
        %v517 = vrot.slane %v512, %v516
        %519 = vmatprep.subr.mxu0 0.0
        %520 = vmatpush1.msra.mxu0 %v511
        %521 = vmatprep.subr.mxu0 0.0
        %522 = vmatpush1.msra.mxu0 %v510
        %523 = vmatprep.subr.mxu0 0.0
        %524 = vmatpush1.msra.mxu0 %v509
        %525 = vmatprep.subr.mxu0 0.0
        %526 = vmatpush1.msra.mxu0 %v508
        %527 = vmatprep.subr.mxu0 0.0
        %528 = vmatpush1.msra.mxu0 %v507
        %529 = vmatprep.subr.mxu0 0.0
        %530 = vmatpush1.msra.mxu0 %v506
        %531 = vmatprep.subr.mxu0 0.0
        %532 = vmatpush1.msra.mxu0 %v505
        %533 = vmatprep.subr.mxu0 0.0
        %534 = vmatpush1.msra.mxu0 %v504
        %535 = vmatprep.subr.mxu0 0.0
        %536 = vmatpush1.msra.mxu0 %v503
        %537 = vmatprep.subr.mxu0 0.0
        %538 = vmatpush1.msra.mxu0 %v502
        %539 = vmatprep.subr.mxu0 0.0
        %540 = vmatpush1.msra.mxu0 %v501
        %541 = vmatprep.subr.mxu0 0.0
        %542 = vmatpush1.msra.mxu0 %v500
        %543 = vmatprep.subr.mxu0 0.0
        %544 = vmatpush1.msra.mxu0 %v499
        %545 = vmatprep.subr.mxu0 0.0
        %546 = vmatpush1.msra.mxu0 %v498
        %547 = vmatprep.subr.mxu0 0.0
        %548 = vmatpush1.msra.mxu0 %v497
        %549 = vmatprep.subr.mxu0 0.0
        %550 = vmatpush1.msra.mxu0 %v496
        %551 = vmatprep.subr.mxu0 0.0
        %552 = vmatpush2.msra.mxu0 0.0
        %553 = vmatprep.subr.mxu0 0.0
        %554 = vmatpush2.msra.mxu0 0.0
        %555 = vmatprep.subr.mxu0 0.0
        %556 = vmatpush2.msra.mxu0 0.0
        %557 = vmatprep.subr.mxu0 0.0
        %558 = vmatpush2.msra.mxu0 0.0
        %559 = vmatprep.subr.mxu0 0.0
        %560 = vmatpush2.msra.mxu0 0.0
        %561 = vmatprep.subr.mxu0 0.0
        %562 = vmatpush2.msra.mxu0 0.0
        %563 = vmatprep.subr.mxu0 0.0
        %564 = vmatpush2.msra.mxu0 0.0
        %565 = vmatprep.subr.mxu0 0.0
        %566 = vmatpush2.msra.mxu0 0.0
        %567 = vmatprep.subr.mxu0 0.0
        %568 = vmatpush2.msra.mxu0 0.0
        %569 = vmatprep.subr.mxu0 0.0
        %570 = vmatpush2.msra.mxu0 0.0
        %571 = vmatprep.subr.mxu0 0.0
        %572 = vmatpush2.msra.mxu0 0.0
        %573 = vmatprep.subr.mxu0 0.0
        %574 = vmatpush2.msra.mxu0 0.0
        %575 = vmatprep.subr.mxu0 0.0
        %576 = vmatpush2.msra.mxu0 0.0
        %577 = vmatprep.subr.mxu0 0.0
        %578 = vmatpush2.msra.mxu0 0.0
        %579 = vmatprep.subr.mxu0 0.0
        %580 = vmatpush2.msra.mxu0 0.0
        %581 = vmatprep.subr.mxu0 0.0
        %582 = vmatpush2.msra.mxu0 0.0
        %583 = vmatprep.mubr.f32.mxu0 0.0
        %584 = vmatmul.mubr.f32.gmra.mxu0 %v492
        %v585 = vpop.f32.mrf.mxu0
        %v586 = vadd.f32 %v517, %v585
        %v587 = vpop.f32.mrf.mxu0
        %588 = vmatprep.mubr.f32.mxu0 0.0
        %589 = vmatmul.mubr.f32.gmra.mxu0 %v493
        %v590 = vpop.f32.mrf.mxu0
        %v591 = vadd.f32 %v517, %v590
        %v592 = vpop.f32.mrf.mxu0
        %593 = vmatprep.mubr.f32.mxu0 0.0
        %594 = vmatmul.mubr.f32.gmra.mxu0 %v494
        %v595 = vpop.f32.mrf.mxu0
        %v596 = vadd.f32 %v517, %v595
        %v597 = vpop.f32.mrf.mxu0
        %598 = vmatprep.mubr.f32.mxu0 0.0
        %599 = vmatmul.mubr.f32.gmra.mxu0 %v495
        %v600 = vpop.f32.mrf.mxu0
        %v601 = vadd.f32 %v517, %v600
        %v602 = vpop.f32.mrf.mxu0
        %603 = vdwg.mxu0
        %v604 = vmax.f32 %v586, 0.0
        %v605 = vmax.f32 %v591, 0.0
        %v606 = vmax.f32 %v596, 0.0
        %v607 = vmax.f32 %v601, 0.0
        %v608 = vld [vmem:[#allocation4] sm:$0xff]
        %v609 = vld [vmem:[#allocation4 + $0x8] sm:$0xff]
        %v610 = vld [vmem:[#allocation4 + $0x10] sm:$0xff]
        %v611 = vld [vmem:[#allocation4 + $0x18] sm:$0xff]
        %v612 = vld [vmem:[#allocation4 + $0x20] sm:$0xff]
        %v613 = vld [vmem:[#allocation4 + $0x28] sm:$0xff]
        %v614 = vld [vmem:[#allocation4 + $0x30] sm:$0xff]
        %v615 = vld [vmem:[#allocation4 + $0x38] sm:$0xff]
        %v616 = vld [vmem:[#allocation4 + $0x40] sm:$0xff]
        %v617 = vld [vmem:[#allocation4 + $0x48] sm:$0xff]
        %v618 = vld [vmem:[#allocation4 + $0x50] sm:$0xff]
        %v619 = vld [vmem:[#allocation4 + $0x58] sm:$0xff]
        %v620 = vld [vmem:[#allocation4 + $0x60] sm:$0xff]
        %v621 = vld [vmem:[#allocation4 + $0x68] sm:$0xff]
        %v622 = vld [vmem:[#allocation4 + $0x70] sm:$0xff]
        %v623 = vld [vmem:[#allocation4 + $0x78] sm:$0xff]
        %v624 = vld [vmem:[%s6] sm:$0x1]
        %v626 = vlaneseq
        %v627 = vshrl.u32 %v626, 7
        %v628 = vsub.s32 0, %v627
        %v629 = vrot.slane %v624, %v628
        %631 = vmatprep.subr.mxu0 0.0
        %632 = vmatpush1.msra.mxu0 %v623
        %633 = vmatprep.subr.mxu0 0.0
        %634 = vmatpush1.msra.mxu0 %v622
        %635 = vmatprep.subr.mxu0 0.0
        %636 = vmatpush1.msra.mxu0 %v621
        %637 = vmatprep.subr.mxu0 0.0
        %638 = vmatpush1.msra.mxu0 %v620
        %639 = vmatprep.subr.mxu0 0.0
        %640 = vmatpush1.msra.mxu0 %v619
        %641 = vmatprep.subr.mxu0 0.0
        %642 = vmatpush1.msra.mxu0 %v618
        %643 = vmatprep.subr.mxu0 0.0
        %644 = vmatpush1.msra.mxu0 %v617
        %645 = vmatprep.subr.mxu0 0.0
        %646 = vmatpush1.msra.mxu0 %v616
        %647 = vmatprep.subr.mxu0 0.0
        %648 = vmatpush1.msra.mxu0 %v615
        %649 = vmatprep.subr.mxu0 0.0
        %650 = vmatpush1.msra.mxu0 %v614
        %651 = vmatprep.subr.mxu0 0.0
        %652 = vmatpush1.msra.mxu0 %v613
        %653 = vmatprep.subr.mxu0 0.0
        %654 = vmatpush1.msra.mxu0 %v612
        %655 = vmatprep.subr.mxu0 0.0
        %656 = vmatpush1.msra.mxu0 %v611
        %657 = vmatprep.subr.mxu0 0.0
        %658 = vmatpush1.msra.mxu0 %v610
        %659 = vmatprep.subr.mxu0 0.0
        %660 = vmatpush1.msra.mxu0 %v609
        %661 = vmatprep.subr.mxu0 0.0
        %662 = vmatpush1.msra.mxu0 %v608
        %663 = vmatprep.subr.mxu0 0.0
        %664 = vmatpush2.msra.mxu0 0.0
        %665 = vmatprep.subr.mxu0 0.0
        %666 = vmatpush2.msra.mxu0 0.0
        %667 = vmatprep.subr.mxu0 0.0
        %668 = vmatpush2.msra.mxu0 0.0
        %669 = vmatprep.subr.mxu0 0.0
        %670 = vmatpush2.msra.mxu0 0.0
        %671 = vmatprep.subr.mxu0 0.0
        %672 = vmatpush2.msra.mxu0 0.0
        %673 = vmatprep.subr.mxu0 0.0
        %674 = vmatpush2.msra.mxu0 0.0
        %675 = vmatprep.subr.mxu0 0.0
        %676 = vmatpush2.msra.mxu0 0.0
        %677 = vmatprep.subr.mxu0 0.0
        %678 = vmatpush2.msra.mxu0 0.0
        %679 = vmatprep.subr.mxu0 0.0
        %680 = vmatpush2.msra.mxu0 0.0
        %681 = vmatprep.subr.mxu0 0.0
        %682 = vmatpush2.msra.mxu0 0.0
        %683 = vmatprep.subr.mxu0 0.0
        %684 = vmatpush2.msra.mxu0 0.0
        %685 = vmatprep.subr.mxu0 0.0
        %686 = vmatpush2.msra.mxu0 0.0
        %687 = vmatprep.subr.mxu0 0.0
        %688 = vmatpush2.msra.mxu0 0.0
        %689 = vmatprep.subr.mxu0 0.0
        %690 = vmatpush2.msra.mxu0 0.0
        %691 = vmatprep.subr.mxu0 0.0
        %692 = vmatpush2.msra.mxu0 0.0
        %693 = vmatprep.subr.mxu0 0.0
        %694 = vmatpush2.msra.mxu0 0.0
        %695 = vmatprep.mubr.f32.mxu0 0.0
        %696 = vmatmul.mubr.f32.gmra.mxu0 %v604
        %v697 = vpop.f32.mrf.mxu0
        %v698 = vadd.f32 %v629, %v697
        %v699 = vpop.f32.mrf.mxu0
        %700 = vmatprep.mubr.f32.mxu0 0.0
        %701 = vmatmul.mubr.f32.gmra.mxu0 %v605
        %v702 = vpop.f32.mrf.mxu0
        %v703 = vadd.f32 %v629, %v702
        %v704 = vpop.f32.mrf.mxu0
        %705 = vmatprep.mubr.f32.mxu0 0.0
        %706 = vmatmul.mubr.f32.gmra.mxu0 %v606
        %v707 = vpop.f32.mrf.mxu0
        %v708 = vadd.f32 %v629, %v707
        %v709 = vpop.f32.mrf.mxu0
        %710 = vmatprep.mubr.f32.mxu0 0.0
        %711 = vmatmul.mubr.f32.gmra.mxu0 %v607
        %v712 = vpop.f32.mrf.mxu0
        %v713 = vadd.f32 %v629, %v712
        %v714 = vpop.f32.mrf.mxu0
        %715 = vdwg.mxu0
        %v716 = vmax.f32 %v698, 0.0
        %v717 = vmax.f32 %v703, 0.0
        %v718 = vmax.f32 %v708, 0.0
        %v719 = vmax.f32 %v713, 0.0
        %v720 = vld [vmem:[#allocation6] sm:$0xff]
        %v721 = vld [vmem:[#allocation6 + $0x8] sm:$0xff]
        %v722 = vld [vmem:[#allocation6 + $0x10] sm:$0xff]
        %v723 = vld [vmem:[#allocation6 + $0x18] sm:$0xff]
        %v724 = vld [vmem:[#allocation6 + $0x20] sm:$0xff]
        %v725 = vld [vmem:[#allocation6 + $0x28] sm:$0xff]
        %v726 = vld [vmem:[#allocation6 + $0x30] sm:$0xff]
        %v727 = vld [vmem:[#allocation6 + $0x38] sm:$0xff]
        %v728 = vld [vmem:[#allocation6 + $0x40] sm:$0xff]
        %v729 = vld [vmem:[#allocation6 + $0x48] sm:$0xff]
        %v730 = vld [vmem:[#allocation6 + $0x50] sm:$0xff]
        %v731 = vld [vmem:[#allocation6 + $0x58] sm:$0xff]
        %v732 = vld [vmem:[#allocation6 + $0x60] sm:$0xff]
        %v733 = vld [vmem:[#allocation6 + $0x68] sm:$0xff]
        %v734 = vld [vmem:[#allocation6 + $0x70] sm:$0xff]
        %v735 = vld [vmem:[#allocation6 + $0x78] sm:$0xff]
        %v736 = vld [vmem:[%s8] sm:$0x1]
        %v738 = vlaneseq
        %v739 = vshrl.u32 %v738, 7
        %v740 = vsub.s32 0, %v739
        %v741 = vrot.slane %v736, %v740
        %743 = vmatprep.subr.mxu0 0.0
        %744 = vmatpush1.msra.mxu0 %v735
        %745 = vmatprep.subr.mxu0 0.0
        %746 = vmatpush1.msra.mxu0 %v734
        %747 = vmatprep.subr.mxu0 0.0
        %748 = vmatpush1.msra.mxu0 %v733
        %749 = vmatprep.subr.mxu0 0.0
        %750 = vmatpush1.msra.mxu0 %v732
        %751 = vmatprep.subr.mxu0 0.0
        %752 = vmatpush1.msra.mxu0 %v731
        %753 = vmatprep.subr.mxu0 0.0
        %754 = vmatpush1.msra.mxu0 %v730
        %755 = vmatprep.subr.mxu0 0.0
        %756 = vmatpush1.msra.mxu0 %v729
        %757 = vmatprep.subr.mxu0 0.0
        %758 = vmatpush1.msra.mxu0 %v728
        %759 = vmatprep.subr.mxu0 0.0
        %760 = vmatpush1.msra.mxu0 %v727
        %761 = vmatprep.subr.mxu0 0.0
        %762 = vmatpush1.msra.mxu0 %v726
        %763 = vmatprep.subr.mxu0 0.0
        %764 = vmatpush1.msra.mxu0 %v725
        %765 = vmatprep.subr.mxu0 0.0
        %766 = vmatpush1.msra.mxu0 %v724
        %767 = vmatprep.subr.mxu0 0.0
        %768 = vmatpush1.msra.mxu0 %v723
        %769 = vmatprep.subr.mxu0 0.0
        %770 = vmatpush1.msra.mxu0 %v722
        %771 = vmatprep.subr.mxu0 0.0
        %772 = vmatpush1.msra.mxu0 %v721
        %773 = vmatprep.subr.mxu0 0.0
        %774 = vmatpush1.msra.mxu0 %v720
        %775 = vmatprep.subr.mxu0 0.0
        %776 = vmatpush2.msra.mxu0 0.0
        %777 = vmatprep.subr.mxu0 0.0
        %778 = vmatpush2.msra.mxu0 0.0
        %779 = vmatprep.subr.mxu0 0.0
        %780 = vmatpush2.msra.mxu0 0.0
        %781 = vmatprep.subr.mxu0 0.0
        %782 = vmatpush2.msra.mxu0 0.0
        %783 = vmatprep.subr.mxu0 0.0
        %784 = vmatpush2.msra.mxu0 0.0
        %785 = vmatprep.subr.mxu0 0.0
        %786 = vmatpush2.msra.mxu0 0.0
        %787 = vmatprep.subr.mxu0 0.0
        %788 = vmatpush2.msra.mxu0 0.0
        %789 = vmatprep.subr.mxu0 0.0
        %790 = vmatpush2.msra.mxu0 0.0
        %791 = vmatprep.subr.mxu0 0.0
        %792 = vmatpush2.msra.mxu0 0.0
        %793 = vmatprep.subr.mxu0 0.0
        %794 = vmatpush2.msra.mxu0 0.0
        %795 = vmatprep.subr.mxu0 0.0
        %796 = vmatpush2.msra.mxu0 0.0
        %797 = vmatprep.subr.mxu0 0.0
        %798 = vmatpush2.msra.mxu0 0.0
        %799 = vmatprep.subr.mxu0 0.0
        %800 = vmatpush2.msra.mxu0 0.0
        %801 = vmatprep.subr.mxu0 0.0
        %802 = vmatpush2.msra.mxu0 0.0
        %803 = vmatprep.subr.mxu0 0.0
        %804 = vmatpush2.msra.mxu0 0.0
        %805 = vmatprep.subr.mxu0 0.0
        %806 = vmatpush2.msra.mxu0 0.0
        %807 = vmatprep.mubr.f32.mxu0 0.0
        %808 = vmatmul.mubr.f32.gmra.mxu0 %v716
        %v809 = vpop.f32.mrf.mxu0
        %v810 = vadd.f32 %v741, %v809
        %v811 = vpop.f32.mrf.mxu0
        %812 = vmatprep.mubr.f32.mxu0 0.0
        %813 = vmatmul.mubr.f32.gmra.mxu0 %v717
        %v814 = vpop.f32.mrf.mxu0
        %v815 = vadd.f32 %v741, %v814
        %v816 = vpop.f32.mrf.mxu0
        %817 = vmatprep.mubr.f32.mxu0 0.0
        %818 = vmatmul.mubr.f32.gmra.mxu0 %v718
        %v819 = vpop.f32.mrf.mxu0
        %v820 = vadd.f32 %v741, %v819
        %v821 = vpop.f32.mrf.mxu0
        %822 = vmatprep.mubr.f32.mxu0 0.0
        %823 = vmatmul.mubr.f32.gmra.mxu0 %v719
        %v824 = vpop.f32.mrf.mxu0
        %v825 = vadd.f32 %v741, %v824
        %v826 = vpop.f32.mrf.mxu0
        %827 = vdwg.mxu0
        %v828 = vand.u32 2147483647, %v810
        %v829 = vand.u32 2147483647, %v815
        %v830 = vand.u32 2147483647, %v820
        %v831 = vand.u32 2147483647, %v825
        %v832 = vsub.f32 0.0, %v828
        %v833 = vsub.f32 0.0, %v829
        %v834 = vsub.f32 0.0, %v830
        %v835 = vsub.f32 0.0, %v831
        %v836 = vmul.f32 %v832, 1.442695
        %v837 = vpow.pop %v836
        %v838 = vmul.f32 %v833, 1.442695
        %v839 = vpow.pop %v838
        %v840 = vmul.f32 %v834, 1.442695
        %v841 = vpow.pop %v840
        %v842 = vmul.f32 %v835, 1.442695
        %v843 = vpow.pop %v842
        %v844 = vadd.f32 %v837, 1.0
        %v845 = vadd.f32 %v839, 1.0
        %v846 = vadd.f32 %v841, 1.0
        %v847 = vadd.f32 %v843, 1.0
        %v848 = vrcp.pop %v844
        %v849 = vmul.f32 1.0, %v848
        %v850 = vrcp.pop %v845
        %v851 = vmul.f32 1.0, %v850
        %v852 = vrcp.pop %v846
        %v853 = vmul.f32 1.0, %v852
        %v854 = vrcp.pop %v847
        %v855 = vmul.f32 1.0, %v854
        %vm856 = vcmp.ge.f32.partialorder %v810, 0.0
        %vm857 = vcmp.ge.f32.partialorder %v815, 0.0
        %vm858 = vcmp.ge.f32.partialorder %v820, 0.0
        %vm859 = vcmp.ge.f32.partialorder %v825, 0.0
        %v860 = vmul.f32 %v837, %v849
        %v861 = vmul.f32 %v839, %v851
        %v862 = vmul.f32 %v841, %v853
        %v863 = vmul.f32 %v843, %v855
        %v864 = vsel %vm856, %v849, %v860
        %v865 = vsel %vm857, %v851, %v861
        %v866 = vsel %vm858, %v853, %v862
        %v867 = vsel %vm859, %v855, %v863
        %868 = vst [vmem:[%s378] sm:$0xff] %v864
        %869 = vst [vmem:[%s378 + $0x8] sm:$0xff] %v865
        %870 = vst [vmem:[%s378 + $0x10] sm:$0xff] %v866
        %871 = vst [vmem:[%s378 + $0x18] sm:$0xff] %v867
        %s872 = smul.u32 4, %s22
        %p873 = scmp.lt.s32.totalorder %s872, 7
        %s874 = scalar_select %p873, %s872, 7
        %s875 = smul.addr %s874, 8
        %s876 = scalar_lea.vmem %s9, %s875
        // Predicated region
        $region69: #{experimental_net_forward.1} parent=55 // pred_check
          %p877 = pneg %p234
        $region70: #{experimental_net_forward.1} parent=55 // pred_check_branch
          %879 = sbr.rel (%p877) target = $region72
        $region71: #{experimental_net_forward.1} parent=55 // pred_region
          %s880 = smul.u32 4, %s22
        $region72: #{experimental_net_forward.1} parent=55 // pred_fallthru
          _
      $region56: #{experimental_net_forward.1} parent=5 // pred_fallthru
        _
      %p881 = scmp.le.s32.totalorder 2, %s17
      // Predicated region
      $region73: #{experimental_net_forward.1} parent=5 // pred_check
        %p882 = pneg %p881
      $region74: #{experimental_net_forward.1} parent=5 // pred_check_branch
        %884 = sbr.rel (%p882) target = $region76
      $region75: #{experimental_net_forward.1} parent=5 // pred_region
        %s885 = ssub.s32 %s17, 2
        // Predicated region
        $region77: #{experimental_net_forward.1} parent=75 // pred_check
          %p886 = pneg %p240
        $region78: #{experimental_net_forward.1} parent=75 // pred_check_branch
          %888 = sbr.rel (%p886) target = $region80
        $region79: #{experimental_net_forward.1} parent=75 // pred_region
          %s889 = smul.u32 4, %s23
          %p890 = scmp.lt.s32.totalorder %s889, 7
          %s891 = scalar_select %p890, %s889, 7
          %s892 = smul.addr %s891, 8
          %s893 = scalar_lea.vmem %s9, %s892
        $region80: #{experimental_net_forward.1} parent=75 // pred_fallthru
          _
      $region76: #{experimental_net_forward.1} parent=5 // pred_fallthru
        _
    $region6: #{experimental_net_forward.1} parent=1 // loop_footer
      %s21 = sadd.s32 1, %s17
    $region7: #{experimental_net_forward.1} parent=1 // loop_footer_branch
      %16 = sbr.rel target = $region3
    $region8: #{experimental_net_forward.1} parent=1 // loop_exit
      _
    %894 = vsyncpa [#allocation3], 1
    %s895 = scalar_lea.sflag [#allocation3], 1
    %896 = vsyncpa %s895, 1
    %897 = vsyncpa [#allocation5], 1

</llo_original>
